<compile_context>
chip_gen: v7x
topology: tpu7x:2x2x1
jax: 0.10.0
libtpu: 0.0.40
codegen_flags: <defaults>
</compile_context>

<pallas_src>
import functools

import jax
import jax.numpy as jnp
from jax.experimental import pallas as pl
from jax.experimental.pallas import tpu as pltpu


def _conv2d_kernel(x_ref, w_ref, o_ref, *, W, HW, KH, KW):
    """Single-shot conv as one im2col MXU matmul with the bias folded in.

    x_ref : (rows_pad, HW)                   images; batch*channels on sublanes, spatial on lanes
    w_ref : (M_pad, KH*KW*rows_pad + 8)      block-diagonal im2col weights + bias column block
    o_ref : (M_pad, HW)                      lane-dense output; valid entries at [:, y*W + x],
                                             y < Hout, x < Wout; rows >= B*Cout are zero padding
    """
    x = x_ref[...]                                        # (rows_pad, HW), f32
    taps = []
    for kh in range(KH):
        for kw in range(KW):
            s = kh * W + kw                               # flat tap offset
            # result[i] = x[i + s]  (pure lane rotation on the XLU; no unaligned slices)
            taps.append(x if s == 0 else pltpu.roll(x, shift=HW - s, axis=1))
    # Constant-ones sublane block: folds the bias add into the same MXU pass.
    taps.append(jnp.ones((8, HW), dtype=x.dtype))
    patches = jnp.concatenate(taps, axis=0)               # (KH*KW*rows_pad + 8, HW)
    o_ref[...] = jnp.dot(w_ref[...], patches,
                         preferred_element_type=jnp.float32).astype(o_ref.dtype)


def prepare_conv2d_params(weight, bias, batch_size):
    """Build the im2col weight matrix ONCE at parameter-load time (not per forward call).

    weight : (Cout, Cin, KH, KW), bias : (Cout,)
    Returns w_big of shape (M_pad, KH*KW*rows_pad + 8) with
        w_big[b*Cout + o, t*rows_pad + b*Cin + c] = weight[o, c, kh_t, kw_t]
        w_big[b*Cout + o, KH*KW*rows_pad]         = bias[o]
    and zeros elsewhere (rows padded to a multiple of 8).
    """
    Cout, Cin, KH, KW = weight.shape
    B = batch_size
    T = KH * KW
    rows = B * Cin
    rows_pad = ((rows + 7) // 8) * 8
    M = B * Cout
    M_pad = ((M + 7) // 8) * 8

    w_tap = jnp.transpose(weight, (2, 3, 1, 0)).reshape(T, Cin, Cout)          # (T, Cin, Cout)
    w4 = jnp.einsum('xy,tco->xotyc', jnp.eye(B, dtype=weight.dtype), w_tap)    # (B,Cout,T,B,Cin)
    w4 = w4.reshape(B, Cout, T, rows)
    w4 = jnp.pad(w4, ((0, 0), (0, 0), (0, 0), (0, rows_pad - rows)))
    w_main = w4.reshape(M, T * rows_pad)

    # Bias columns: one 8-wide block whose first column carries the (batch-replicated) bias.
    b_blk = jnp.zeros((M, 8), dtype=weight.dtype).at[:, 0].set(jnp.tile(bias, B))
    w_big = jnp.concatenate([w_main, b_blk], axis=1)                            # (M, K)
    w_big = jnp.pad(w_big, ((0, M_pad - M), (0, 0)))                            # (M_pad, K)
    return w_big


@functools.partial(jax.jit, static_argnames=("Cout", "KH", "KW"))
def conv2d_pallas(x_nchw, w_big, *, Cout, KH, KW):
    """Equivalent of nn.Conv2d(Cin, Cout, (KH, KW), stride=1, padding=0)(x), NCHW in/out."""
    B, Cin, H, W = x_nchw.shape
    # The lane-roll im2col is only valid for stride=1 / padding=0 with the window inside the
    # image: wrapped taps then land only in output positions with y>=Hout or x>=Wout, which are
    # cropped below. Keep this assert so future shape changes don't break the invariant.
    assert KH <= H and KW <= W, "kernel window must fit inside the image (stride=1, padding=0)"
    Hout, Wout = H - KH + 1, W - KW + 1
    HW = H * W
    T = KH * KW

    rows = B * Cin
    rows_pad = ((rows + 7) // 8) * 8
    M = B * Cout
    M_pad = ((M + 7) // 8) * 8
    assert w_big.shape == (M_pad, T * rows_pad + 8), "w_big does not match x's batch / shapes"

    # Pure reshape of the activation (no transpose): spatial on lanes, batch*channels on sublanes.
    x2d = x_nchw.reshape(rows, HW)
    if rows_pad != rows:
        x2d = jnp.pad(x2d, ((0, rows_pad - rows), (0, 0)))

    kernel = functools.partial(_conv2d_kernel, W=W, HW=HW, KH=KH, KW=KW)

    out2d = pl.pallas_call(
        kernel,
        out_shape=jax.ShapeDtypeStruct((M_pad, HW), x_nchw.dtype),
        in_specs=[
            pl.BlockSpec(memory_space=pltpu.MemorySpace.VMEM),   # x2d    (rows_pad, HW)
            pl.BlockSpec(memory_space=pltpu.MemorySpace.VMEM),   # w_big  (M_pad, T*rows_pad + 8)
        ],
        out_specs=pl.BlockSpec(memory_space=pltpu.MemorySpace.VMEM),
    )(x2d, w_big)

    # Pure reshape back to NCHW; drop padded rows and the out-of-window spatial positions.
    # (Downstream consumers that can take the lane-dense padded (M_pad, HW) slab should skip this.)
    return out2d[:M].reshape(B, Cout, H, W)[:, :, :Hout, :Wout]


if __name__ == "__main__":
    key = jax.random.PRNGKey(0)
    kx, kw, kb = jax.random.split(key, 3)

    # Small shapes consistent with the module: batch=2, Cin=3, 16x16 spatial.
    B, Cin, H, W = 2, 3, 16, 16
    Cout, KH, KW = 6, 3, 3

    x = jax.random.normal(kx, (B, Cin, H, W), dtype=jnp.float32)
    # Deterministic param init (Kaiming-uniform-like bound, as in nn.Conv2d).
    fan_in = Cin * KH * KW
    bound = 1.0 / (fan_in ** 0.5)
    weight = jax.random.uniform(kw, (Cout, Cin, KH, KW),
                                minval=-bound, maxval=bound, dtype=jnp.float32)
    bias = jax.random.uniform(kb, (Cout,),
                              minval=-bound, maxval=bound, dtype=jnp.float32)

    # Built ONCE at parameter-load time (depends only on weight/bias/batch), not per forward call.
    w_big = jax.block_until_ready(prepare_conv2d_params(weight, bias, batch_size=B))

    out = conv2d_pallas(x, w_big, Cout=Cout, KH=KH, KW=KW)
    out = jax.block_until_ready(out)

    # Cross-check against XLA's conv (pure-JAX reference).
    ref = jax.lax.conv_general_dilated(
        x, weight, window_strides=(1, 1), padding="VALID",
        dimension_numbers=("NCHW", "OIHW", "NCHW"))
    ref = ref + bias[None, :, None, None]
    assert out.shape == (B, Cout, H - KH + 1, W - KW + 1)
    assert jnp.allclose(out, ref, atol=1e-5, rtol=1e-5)

    print("KERNEL_OK")
</pallas_src>

<mosaic_0001>
module attributes {stable_mosaic.version = 11 : i64} {
  func.func @_conv2d_kernel(%arg0: memref<8x256xf32, #tpu.memory_space<vmem>>, %arg1: memref<16x80xf32, #tpu.memory_space<vmem>>, %arg2: memref<16x256xf32, #tpu.memory_space<vmem>>) attributes {dimension_semantics = [], scalar_prefetch = 0 : i64, scratch_operands = 0 : i64, tpu.core_type = #tpu.core_type<tc>} {
    %c0 = arith.constant 0 : index
    %c0_0 = arith.constant 0 : index
    %0 = vector.load %arg0[%c0, %c0_0] : memref<8x256xf32, #tpu.memory_space<vmem>>, vector<8x256xf32>
    %c255_i32 = arith.constant 255 : i32
    %1 = tpu.dynamic_rotate %0 by %c255_i32 dim 1 : vector<8x256xf32>, i32 -> vector<8x256xf32>
    %c254_i32 = arith.constant 254 : i32
    %2 = tpu.dynamic_rotate %0 by %c254_i32 dim 1 : vector<8x256xf32>, i32 -> vector<8x256xf32>
    %c240_i32 = arith.constant 240 : i32
    %3 = tpu.dynamic_rotate %0 by %c240_i32 dim 1 : vector<8x256xf32>, i32 -> vector<8x256xf32>
    %c239_i32 = arith.constant 239 : i32
    %4 = tpu.dynamic_rotate %0 by %c239_i32 dim 1 : vector<8x256xf32>, i32 -> vector<8x256xf32>
    %c238_i32 = arith.constant 238 : i32
    %5 = tpu.dynamic_rotate %0 by %c238_i32 dim 1 : vector<8x256xf32>, i32 -> vector<8x256xf32>
    %c224_i32 = arith.constant 224 : i32
    %6 = tpu.dynamic_rotate %0 by %c224_i32 dim 1 : vector<8x256xf32>, i32 -> vector<8x256xf32>
    %c223_i32 = arith.constant 223 : i32
    %7 = tpu.dynamic_rotate %0 by %c223_i32 dim 1 : vector<8x256xf32>, i32 -> vector<8x256xf32>
    %c222_i32 = arith.constant 222 : i32
    %8 = tpu.dynamic_rotate %0 by %c222_i32 dim 1 : vector<8x256xf32>, i32 -> vector<8x256xf32>
    %cst = arith.constant 1.000000e+00 : f32
    %9 = vector.broadcast %cst : f32 to vector<8x256xf32>
    %10 = tpu.concatenate %0, %1, %2, %3, %4, %5, %6, %7, %8, %9 in 0 : vector<8x256xf32>, vector<8x256xf32>, vector<8x256xf32>, vector<8x256xf32>, vector<8x256xf32>, vector<8x256xf32>, vector<8x256xf32>, vector<8x256xf32>, vector<8x256xf32>, vector<8x256xf32> -> vector<80x256xf32>
    %c0_1 = arith.constant 0 : index
    %c0_2 = arith.constant 0 : index
    %11 = vector.load %arg1[%c0_1, %c0_2] : memref<16x80xf32, #tpu.memory_space<vmem>>, vector<16x80xf32>
    %cst_3 = arith.constant dense<0.000000e+00> : vector<16x256xf32>
    %12 = tpu.matmul %11, %10, %cst_3 {dimension_numbers = #tpu.dot_dimension_numbers<[1], [0], [0], [1], [0, 0, 1, 1], [], []>} : vector<16x80xf32>, vector<80x256xf32>, vector<16x256xf32> -> vector<16x256xf32>
    %c0_4 = arith.constant 0 : index
    %c0_5 = arith.constant 0 : index
    %13 = vector.load %arg2[%c0_4, %c0_5] : memref<16x256xf32, #tpu.memory_space<vmem>>, vector<16x256xf32>
    tpu.vector_store %arg2[%c0_4, %c0_5], %12 {strides = array<i32>} : memref<16x256xf32, #tpu.memory_space<vmem>>, vector<16x256xf32>,
    return
  }
}

</mosaic_0001>

<llo_original>
// kernel: conv2d_pallas.1
$region0: #{conv2d_pallas.1}
  #allocation0 [shape = 'u32[]', space=smem, size = 0x4, offset = 0x4, fixed_abs, tag = 'smem constant byte address 0x4 - core index']
  #allocation1 [shape = 'u32[144,128]{1,0:T(1,128)}', space=vmem, size = 0x12000, scoped, tag = 'internal scratch']
  %s0 = inlined_call_operand.vmem [shape: f32[8,256], index: 0, kind: input, shape index: {}]
  %s1 = inlined_call_operand.vmem [shape: f32[16,80], index: 1, kind: input, shape index: {}]
  %s2 = inlined_call_operand.vmem [shape: f32[16,256], index: 2, kind: output, shape index: {}]
  %s3 = sld [smem:[#allocation0]]
  $region18: #{conv2d_pallas.1} parent=0
    _
  %s5 = ssub.s32 1, %s3
  %s6 = scalar_select 0, %s5, %s3
  // Predicated region
  $region2: #{conv2d_pallas.1} parent=0 // pred_check
    _
  $region3: #{conv2d_pallas.1} parent=0 // pred_check_branch
    %8 = sbr.rel (0) target = $region5
  $region4: #{conv2d_pallas.1} parent=0 // pred_region
    _
  $region5: #{conv2d_pallas.1} parent=0 // pred_fallthru
    _
  // Predicated region
  $region6: #{conv2d_pallas.1} parent=0 // pred_check
    _
  $region7: #{conv2d_pallas.1} parent=0 // pred_check_branch
    %10 = sbr.rel (0) target = $region9
  $region8: #{conv2d_pallas.1} parent=0 // pred_region
    _
  $region9: #{conv2d_pallas.1} parent=0 // pred_fallthru
    _
  %v11 = vld [vmem:[%s0] sm:$0xff]
  %v12 = vld [vmem:[%s0 + $0x8] sm:$0xff]
  %13 = vrot.lane.b32.xlu0 %v11, 127
  %v14 = vpop.permute.xlu0 %13
  %15 = vrot.lane.b32.xlu0 %v12, 127
  %v16 = vpop.permute.xlu0 %15
  %v17 = vlaneseq
  %v18 = vand.u32 %v17, 127
  %vm19 = vcmp.lt.s32.totalorder %v18, 127
  %v20 = vsel %vm19, %v14, %v16
  %v21 = vsel %vm19, %v16, %v14
  %22 = vrot.lane.b32.xlu0 %v11, 126
  %v23 = vpop.permute.xlu0 %22
  %24 = vrot.lane.b32.xlu0 %v12, 126
  %v25 = vpop.permute.xlu0 %24
  %vm26 = vcmp.lt.s32.totalorder %v18, 126
  %v27 = vsel %vm26, %v23, %v25
  %v28 = vsel %vm26, %v25, %v23
  %29 = vrot.lane.b32.xlu0 %v11, 112
  %v30 = vpop.permute.xlu0 %29
  %31 = vrot.lane.b32.xlu0 %v12, 112
  %v32 = vpop.permute.xlu0 %31
  %vm33 = vcmp.lt.s32.totalorder %v18, 112
  %v34 = vsel %vm33, %v30, %v32
  %v35 = vsel %vm33, %v32, %v30
  %36 = vrot.lane.b32.xlu0 %v11, 111
  %v37 = vpop.permute.xlu0 %36
  %38 = vrot.lane.b32.xlu0 %v12, 111
  %v39 = vpop.permute.xlu0 %38
  %vm40 = vcmp.lt.s32.totalorder %v18, 111
  %v41 = vsel %vm40, %v37, %v39
  %v42 = vsel %vm40, %v39, %v37
  %43 = vrot.lane.b32.xlu0 %v11, 110
  %v44 = vpop.permute.xlu0 %43
  %45 = vrot.lane.b32.xlu0 %v12, 110
  %v46 = vpop.permute.xlu0 %45
  %vm47 = vcmp.lt.s32.totalorder %v18, 110
  %v48 = vsel %vm47, %v44, %v46
  %v49 = vsel %vm47, %v46, %v44
  %50 = vrot.lane.b32.xlu0 %v11, 96
  %v51 = vpop.permute.xlu0 %50
  %52 = vrot.lane.b32.xlu0 %v12, 96
  %v53 = vpop.permute.xlu0 %52
  %vm54 = vcmp.lt.s32.totalorder %v18, 96
  %v55 = vsel %vm54, %v51, %v53
  %v56 = vsel %vm54, %v53, %v51
  %57 = vrot.lane.b32.xlu0 %v11, 95
  %v58 = vpop.permute.xlu0 %57
  %59 = vrot.lane.b32.xlu0 %v12, 95
  %v60 = vpop.permute.xlu0 %59
  %vm61 = vcmp.lt.s32.totalorder %v18, 95
  %v62 = vsel %vm61, %v58, %v60
  %v63 = vsel %vm61, %v60, %v58
  %64 = vrot.lane.b32.xlu0 %v11, 94
  %v65 = vpop.permute.xlu0 %64
  %66 = vrot.lane.b32.xlu0 %v12, 94
  %v67 = vpop.permute.xlu0 %66
  %vm68 = vcmp.lt.s32.totalorder %v18, 94
  %v69 = vsel %vm68, %v65, %v67
  %v70 = vsel %vm68, %v67, %v65
  %v71 = vld [vmem:[%s1] sm:$0xff]
  %v72 = vld [vmem:[%s1 + $0x8] sm:$0xff]
  %vm73 = vcmask 654336
  %v75 = vsel %vm73, %v71, 0
  %v78 = vsel %vm73, %v72, 0
  %80 = vmatprep.subr.mxu0 %v12
  %81 = vmatpush1.msra.mxu0 %v11
  %82 = vmatprep.subr.mxu0 %v21
  %83 = vmatpush1.msra.mxu0 %v20
  %84 = vmatprep.subr.mxu0 %v28
  %85 = vmatpush1.msra.mxu0 %v27
  %86 = vmatprep.subr.mxu0 %v35
  %87 = vmatpush1.msra.mxu0 %v34
  %88 = vmatprep.subr.mxu0 %v42
  %89 = vmatpush1.msra.mxu0 %v41
  %90 = vmatprep.subr.mxu0 %v49
  %91 = vmatpush1.msra.mxu0 %v48
  %92 = vmatprep.subr.mxu0 %v56
  %93 = vmatpush1.msra.mxu0 %v55
  %94 = vmatprep.subr.mxu0 %v63
  %95 = vmatpush1.msra.mxu0 %v62
  %96 = vmatprep.subr.mxu0 %v70
  %97 = vmatpush1.msra.mxu0 %v69
  %98 = vmatprep.subr.mxu0 1.0
  %99 = vmatpush1.msra.mxu0 1.0
  %100 = vmatprep.subr.mxu0 0.0
  %101 = vmatpush1.msra.mxu0 0.0
  %102 = vmatprep.subr.mxu0 0.0
  %103 = vmatpush1.msra.mxu0 0.0
  %104 = vmatprep.subr.mxu0 0.0
  %105 = vmatpush1.msra.mxu0 0.0
  %106 = vmatprep.subr.mxu0 0.0
  %107 = vmatpush1.msra.mxu0 0.0
  %108 = vmatprep.subr.mxu0 0.0
  %109 = vmatpush1.msra.mxu0 0.0
  %110 = vmatprep.subr.mxu0 0.0
  %111 = vmatpush1.msra.mxu0 0.0
  %112 = vmatprep.subr.mxu0 0.0
  %113 = vmatpush1.msra.mxu0 0.0
  %114 = vmatprep.subr.mxu0 0.0
  %115 = vmatpush1.msra.mxu0 0.0
  %116 = vmatprep.subr.mxu0 0.0
  %117 = vmatpush1.msra.mxu0 0.0
  %118 = vmatprep.subr.mxu0 0.0
  %119 = vmatpush1.msra.mxu0 0.0
  %120 = vmatprep.subr.mxu0 0.0
  %121 = vmatpush1.msra.mxu0 0.0
  %122 = vmatprep.subr.mxu0 0.0
  %123 = vmatpush1.msra.mxu0 0.0
  %124 = vmatprep.subr.mxu0 0.0
  %125 = vmatpush1.msra.mxu0 0.0
  %126 = vmatprep.subr.mxu0 0.0
  %127 = vmatpush1.msra.mxu0 0.0
  %128 = vmatprep.subr.mxu0 0.0
  %129 = vmatpush1.msra.mxu0 0.0
  %130 = vmatprep.subr.mxu0 0.0
  %131 = vmatpush1.msra.mxu0 0.0
  %132 = vmatprep.subr.mxu0 0.0
  %133 = vmatpush1.msra.mxu0 0.0
  %134 = vmatprep.subr.mxu0 0.0
  %135 = vmatpush1.msra.mxu0 0.0
  %136 = vmatprep.subr.mxu0 0.0
  %137 = vmatpush1.msra.mxu0 0.0
  %138 = vmatprep.subr.mxu0 0.0
  %139 = vmatpush1.msra.mxu0 0.0
  %140 = vmatprep.subr.mxu0 0.0
  %141 = vmatpush1.msra.mxu0 0.0
  %142 = vmatprep.subr.mxu0 0.0
  %143 = vmatpush1.msra.mxu0 0.0
  %144 = vmatprep.mubr.f32.mxu0 0.0
  %145 = vmatmul.mubr.f32.gmra.mrb[0].mxu0 %v75
  %v146 = vpop.f32.mrb[0].mxu0
  %v147 = vadd.f32 0.0, %v146
  %v148 = vpop.f32.mrb[0].mxu0
  %v149 = vadd.f32 0.0, %v148
  %150 = vmatprep.mubr.f32.mxu0 0.0
  %151 = vmatmul.mubr.f32.gmra.mrb[0].mxu0 %v78
  %v152 = vpop.f32.mrb[0].mxu0
  %v153 = vadd.f32 0.0, %v152
  %v154 = vpop.f32.mrb[0].mxu0
  %v155 = vadd.f32 0.0, %v154
  %156 = vdwg.mxu0
  %157 = vst [vmem:[%s2] sm:$0xff] %v147
  %158 = vst [vmem:[%s2 + $0x8] sm:$0xff] %v149
  %159 = vst [vmem:[%s2 + $0x10] sm:$0xff] %v153
  %160 = vst [vmem:[%s2 + $0x18] sm:$0xff] %v155
  // Predicated region
  $region10: #{conv2d_pallas.1} parent=0 // pred_check
    _
  $region11: #{conv2d_pallas.1} parent=0 // pred_check_branch
    %162 = sbr.rel (0) target = $region13
  $region12: #{conv2d_pallas.1} parent=0 // pred_region
    _
  $region13: #{conv2d_pallas.1} parent=0 // pred_fallthru
    _
  // Predicated region
  $region14: #{conv2d_pallas.1} parent=0 // pred_check
    _
  $region15: #{conv2d_pallas.1} parent=0 // pred_check_branch
    %164 = sbr.rel (0) target = $region17
  $region16: #{conv2d_pallas.1} parent=0 // pred_region
    _
  $region17: #{conv2d_pallas.1} parent=0 // pred_fallthru
    _

</llo_original>
